<compile_context>
chip_gen: v7x
topology: tpu7x:2x2x1
jax: 0.10.0
libtpu: 0.0.40
codegen_flags: <defaults>
</compile_context>

<pallas_src>
import jax
import jax.numpy as jnp
from jax.experimental import pallas as pl
from jax.experimental.pallas import tpu as pltpu

NUM_LAYERS = 10        # Block(num_layers=10) default from the PyTorch module
FEATURES = 100         # logical feature size of every Linear(100, 100)
F_PAD = 128            # lane-aligned feature size used inside the kernel
_MAX_SINGLE_TILE_B = 512  # above this, tile the batch at 128 rows per grid step


def _block_kernel(x_ref, w_ref, b_ref, o_ref):
    """Fused 10 x (Linear + ReLU) + residual on one (bm, 128) batch tile.

    x_ref: (bm, 128)       activation / residual input (zero-padded lanes)
    w_ref: (10, 128, 128)  all layer weights, resident in VMEM
    b_ref: (10, 1, 128)    all layer biases, already 2-D so the add broadcasts for free
    o_ref: (bm, 128)       output tile
    """
    x = x_ref[...]
    y = x
    # Statically unrolled over the 10 resident layers; activation stays in registers.
    for l in range(NUM_LAYERS):
        h = jnp.dot(y, w_ref[l], preferred_element_type=jnp.float32)
        y = jnp.maximum(h + b_ref[l], 0.0)
    # Residual connection fused into the same kernel: out = x + y.
    o_ref[...] = (x + y).astype(o_ref.dtype)


def block_forward(x, w, b):
    """x: (B, 100); w: (10, 100, 100) laid out so y = y @ w[l] + b[l]; b: (10, 100)."""
    B, F = x.shape
    assert F == FEATURES
    assert w.shape == (NUM_LAYERS, FEATURES, FEATURES)
    assert b.shape == (NUM_LAYERS, FEATURES)

    # Sublane-align the batch (>=8 rows) and lane-align the features (128).
    if B <= _MAX_SINGLE_TILE_B:
        bm = max(8, pl.cdiv(B, 8) * 8)       # single tile, padded to a multiple of 8 rows
    else:
        bm = 128                             # tile large batches; "parallel" axis -> v7x megacore
    b_rows = pl.cdiv(B, bm) * bm
    grid_b = b_rows // bm

    # Zero padding keeps the math exact: padded weight rows/cols and padded bias lanes are 0,
    # so padded lanes stay 0 through matmul+ReLU and never leak into real lanes.
    x_p = jnp.zeros((b_rows, F_PAD), jnp.float32).at[:B, :FEATURES].set(x.astype(jnp.float32))
    w_p = jnp.zeros((NUM_LAYERS, F_PAD, F_PAD), jnp.float32).at[:, :FEATURES, :FEATURES].set(
        w.astype(jnp.float32))
    b_p = jnp.zeros((NUM_LAYERS, 1, F_PAD), jnp.float32).at[:, 0, :FEATURES].set(
        b.astype(jnp.float32))

    out_p = pl.pallas_call(
        _block_kernel,
        out_shape=jax.ShapeDtypeStruct((b_rows, F_PAD), jnp.float32),
        grid_spec=pltpu.PrefetchScalarGridSpec(
            num_scalar_prefetch=0,
            grid=(grid_b,),
            in_specs=[
                pl.BlockSpec((bm, F_PAD), lambda i: (i, 0)),                     # batch tile
                pl.BlockSpec((NUM_LAYERS, F_PAD, F_PAD), lambda i: (0, 0, 0)),   # weights, resident
                pl.BlockSpec((NUM_LAYERS, 1, F_PAD), lambda i: (0, 0, 0)),       # biases, resident
            ],
            out_specs=pl.BlockSpec((bm, F_PAD), lambda i: (i, 0)),
        ),
        compiler_params=pltpu.CompilerParams(
            dimension_semantics=("parallel",),   # batch tiles are independent
        ),
    )(x_p, w_p, b_p)

    # Slice away the batch/lane padding outside the kernel.
    return out_p[:B, :FEATURES]


def block_reference(x, w, b):
    """Pure-JAX reference of Block.forward: y = x; y = relu(linear(y)) x 10; return x + y."""
    y = x.astype(jnp.float32)
    for l in range(NUM_LAYERS):
        y = jnp.maximum(
            jnp.dot(y, w[l], precision=jax.lax.Precision.HIGHEST) + b[l], 0.0)
    return x + y


if __name__ == "__main__":
    key = jax.random.PRNGKey(0)
    k_x, k_w, k_b = jax.random.split(key, 3)

    B = 2  # small batch; features fixed at 100 by the module

    x = jax.random.normal(k_x, (B, FEATURES), dtype=jnp.float32)
    # He-style scale so activations stay numerically alive across the ReLU stack.
    w = jax.random.normal(k_w, (NUM_LAYERS, FEATURES, FEATURES), dtype=jnp.float32) * jnp.sqrt(2.0 / FEATURES)
    b = jax.random.normal(k_b, (NUM_LAYERS, FEATURES), dtype=jnp.float32) * 0.01

    out = jax.block_until_ready(jax.jit(block_forward)(x, w, b))
    ref = jax.block_until_ready(block_reference(x, w, b))

    assert out.shape == (B, FEATURES), f"bad output shape {out.shape}"
    assert jnp.allclose(out, ref, rtol=1e-3, atol=1e-3), "Pallas output mismatch vs reference"

    print("KERNEL_OK")
</pallas_src>

<mosaic_0001>
module attributes {stable_mosaic.version = 11 : i64} {
  func.func @_block_kernel(%arg0: i32, %arg1: memref<8x128xf32, #tpu.memory_space<vmem>>, %arg2: memref<10x128x128xf32, #tpu.memory_space<vmem>>, %arg3: memref<10x1x128xf32, #tpu.memory_space<vmem>>, %arg4: memref<8x128xf32, #tpu.memory_space<vmem>>) attributes {dimension_semantics = [#tpu.dimension_semantics<parallel>], iteration_bounds = array<i64: 1>, scalar_prefetch = 0 : i64, scratch_operands = 0 : i64, tpu.core_type = #tpu.core_type<tc>, window_params = [{transform_indices = @transform_0, window_bounds = array<i64: 8, 128>}, {pipeline_mode = #tpu.pipeline_mode<synchronous>, transform_indices = @transform_1, window_bounds = array<i64: 10, 128, 128>}, {pipeline_mode = #tpu.pipeline_mode<synchronous>, transform_indices = @transform_2, window_bounds = array<i64: 10, 1, 128>}, {transform_indices = @transform_3, window_bounds = array<i64: 8, 128>}]} {
    %c0 = arith.constant 0 : index
    %c0_0 = arith.constant 0 : index
    %0 = vector.load %arg1[%c0, %c0_0] : memref<8x128xf32, #tpu.memory_space<vmem>>, vector<8x128xf32>
    %c0_1 = arith.constant 0 : index
    %c0_2 = arith.constant 0 : index
    %c0_3 = arith.constant 0 : index
    %1 = vector.load %arg2[%c0_1, %c0_2, %c0_3] : memref<10x128x128xf32, #tpu.memory_space<vmem>>, vector<1x128x128xf32>
    %2 = vector.shape_cast %1 : vector<1x128x128xf32> to vector<128x128xf32>
    %cst = arith.constant dense<0.000000e+00> : vector<8x128xf32>
    %3 = tpu.matmul %0, %2, %cst {dimension_numbers = #tpu.dot_dimension_numbers<[1], [0], [0], [1], [0, 0, 1, 1], [], []>} : vector<8x128xf32>, vector<128x128xf32>, vector<8x128xf32> -> vector<8x128xf32>
    %c0_4 = arith.constant 0 : index
    %c0_5 = arith.constant 0 : index
    %c0_6 = arith.constant 0 : index
    %4 = vector.load %arg3[%c0_4, %c0_5, %c0_6] : memref<10x1x128xf32, #tpu.memory_space<vmem>>, vector<1x1x128xf32>
    %5 = vector.shape_cast %4 : vector<1x1x128xf32> to vector<1x128xf32>
    %6 = vector.broadcast %5 : vector<1x128xf32> to vector<8x128xf32>
    %7 = arith.addf %3, %6 : vector<8x128xf32>
    %cst_7 = arith.constant 0.000000e+00 : f32
    %8 = vector.broadcast %cst_7 : f32 to vector<8x128xf32>
    %9 = arith.maximumf %7, %8 : vector<8x128xf32>
    %c1 = arith.constant 1 : index
    %c0_8 = arith.constant 0 : index
    %c0_9 = arith.constant 0 : index
    %10 = vector.load %arg2[%c1, %c0_8, %c0_9] : memref<10x128x128xf32, #tpu.memory_space<vmem>>, vector<1x128x128xf32>
    %11 = vector.shape_cast %10 : vector<1x128x128xf32> to vector<128x128xf32>
    %cst_10 = arith.constant dense<0.000000e+00> : vector<8x128xf32>
    %12 = tpu.matmul %9, %11, %cst_10 {dimension_numbers = #tpu.dot_dimension_numbers<[1], [0], [0], [1], [0, 0, 1, 1], [], []>} : vector<8x128xf32>, vector<128x128xf32>, vector<8x128xf32> -> vector<8x128xf32>
    %c1_11 = arith.constant 1 : index
    %c0_12 = arith.constant 0 : index
    %c0_13 = arith.constant 0 : index
    %13 = vector.load %arg3[%c1_11, %c0_12, %c0_13] : memref<10x1x128xf32, #tpu.memory_space<vmem>>, vector<1x1x128xf32>
    %14 = vector.shape_cast %13 : vector<1x1x128xf32> to vector<1x128xf32>
    %15 = vector.broadcast %14 : vector<1x128xf32> to vector<8x128xf32>
    %16 = arith.addf %12, %15 : vector<8x128xf32>
    %cst_14 = arith.constant 0.000000e+00 : f32
    %17 = vector.broadcast %cst_14 : f32 to vector<8x128xf32>
    %18 = arith.maximumf %16, %17 : vector<8x128xf32>
    %c2 = arith.constant 2 : index
    %c0_15 = arith.constant 0 : index
    %c0_16 = arith.constant 0 : index
    %19 = vector.load %arg2[%c2, %c0_15, %c0_16] : memref<10x128x128xf32, #tpu.memory_space<vmem>>, vector<1x128x128xf32>
    %20 = vector.shape_cast %19 : vector<1x128x128xf32> to vector<128x128xf32>
    %cst_17 = arith.constant dense<0.000000e+00> : vector<8x128xf32>
    %21 = tpu.matmul %18, %20, %cst_17 {dimension_numbers = #tpu.dot_dimension_numbers<[1], [0], [0], [1], [0, 0, 1, 1], [], []>} : vector<8x128xf32>, vector<128x128xf32>, vector<8x128xf32> -> vector<8x128xf32>
    %c2_18 = arith.constant 2 : index
    %c0_19 = arith.constant 0 : index
    %c0_20 = arith.constant 0 : index
    %22 = vector.load %arg3[%c2_18, %c0_19, %c0_20] : memref<10x1x128xf32, #tpu.memory_space<vmem>>, vector<1x1x128xf32>
    %23 = vector.shape_cast %22 : vector<1x1x128xf32> to vector<1x128xf32>
    %24 = vector.broadcast %23 : vector<1x128xf32> to vector<8x128xf32>
    %25 = arith.addf %21, %24 : vector<8x128xf32>
    %cst_21 = arith.constant 0.000000e+00 : f32
    %26 = vector.broadcast %cst_21 : f32 to vector<8x128xf32>
    %27 = arith.maximumf %25, %26 : vector<8x128xf32>
    %c3 = arith.constant 3 : index
    %c0_22 = arith.constant 0 : index
    %c0_23 = arith.constant 0 : index
    %28 = vector.load %arg2[%c3, %c0_22, %c0_23] : memref<10x128x128xf32, #tpu.memory_space<vmem>>, vector<1x128x128xf32>
    %29 = vector.shape_cast %28 : vector<1x128x128xf32> to vector<128x128xf32>
    %cst_24 = arith.constant dense<0.000000e+00> : vector<8x128xf32>
    %30 = tpu.matmul %27, %29, %cst_24 {dimension_numbers = #tpu.dot_dimension_numbers<[1], [0], [0], [1], [0, 0, 1, 1], [], []>} : vector<8x128xf32>, vector<128x128xf32>, vector<8x128xf32> -> vector<8x128xf32>
    %c3_25 = arith.constant 3 : index
    %c0_26 = arith.constant 0 : index
    %c0_27 = arith.constant 0 : index
    %31 = vector.load %arg3[%c3_25, %c0_26, %c0_27] : memref<10x1x128xf32, #tpu.memory_space<vmem>>, vector<1x1x128xf32>
    %32 = vector.shape_cast %31 : vector<1x1x128xf32> to vector<1x128xf32>
    %33 = vector.broadcast %32 : vector<1x128xf32> to vector<8x128xf32>
    %34 = arith.addf %30, %33 : vector<8x128xf32>
    %cst_28 = arith.constant 0.000000e+00 : f32
    %35 = vector.broadcast %cst_28 : f32 to vector<8x128xf32>
    %36 = arith.maximumf %34, %35 : vector<8x128xf32>
    %c4 = arith.constant 4 : index
    %c0_29 = arith.constant 0 : index
    %c0_30 = arith.constant 0 : index
    %37 = vector.load %arg2[%c4, %c0_29, %c0_30] : memref<10x128x128xf32, #tpu.memory_space<vmem>>, vector<1x128x128xf32>
    %38 = vector.shape_cast %37 : vector<1x128x128xf32> to vector<128x128xf32>
    %cst_31 = arith.constant dense<0.000000e+00> : vector<8x128xf32>
    %39 = tpu.matmul %36, %38, %cst_31 {dimension_numbers = #tpu.dot_dimension_numbers<[1], [0], [0], [1], [0, 0, 1, 1], [], []>} : vector<8x128xf32>, vector<128x128xf32>, vector<8x128xf32> -> vector<8x128xf32>
    %c4_32 = arith.constant 4 : index
    %c0_33 = arith.constant 0 : index
    %c0_34 = arith.constant 0 : index
    %40 = vector.load %arg3[%c4_32, %c0_33, %c0_34] : memref<10x1x128xf32, #tpu.memory_space<vmem>>, vector<1x1x128xf32>
    %41 = vector.shape_cast %40 : vector<1x1x128xf32> to vector<1x128xf32>
    %42 = vector.broadcast %41 : vector<1x128xf32> to vector<8x128xf32>
    %43 = arith.addf %39, %42 : vector<8x128xf32>
    %cst_35 = arith.constant 0.000000e+00 : f32
    %44 = vector.broadcast %cst_35 : f32 to vector<8x128xf32>
    %45 = arith.maximumf %43, %44 : vector<8x128xf32>
    %c5 = arith.constant 5 : index
    %c0_36 = arith.constant 0 : index
    %c0_37 = arith.constant 0 : index
    %46 = vector.load %arg2[%c5, %c0_36, %c0_37] : memref<10x128x128xf32, #tpu.memory_space<vmem>>, vector<1x128x128xf32>
    %47 = vector.shape_cast %46 : vector<1x128x128xf32> to vector<128x128xf32>
    %cst_38 = arith.constant dense<0.000000e+00> : vector<8x128xf32>
    %48 = tpu.matmul %45, %47, %cst_38 {dimension_numbers = #tpu.dot_dimension_numbers<[1], [0], [0], [1], [0, 0, 1, 1], [], []>} : vector<8x128xf32>, vector<128x128xf32>, vector<8x128xf32> -> vector<8x128xf32>
    %c5_39 = arith.constant 5 : index
    %c0_40 = arith.constant 0 : index
    %c0_41 = arith.constant 0 : index
    %49 = vector.load %arg3[%c5_39, %c0_40, %c0_41] : memref<10x1x128xf32, #tpu.memory_space<vmem>>, vector<1x1x128xf32>
    %50 = vector.shape_cast %49 : vector<1x1x128xf32> to vector<1x128xf32>
    %51 = vector.broadcast %50 : vector<1x128xf32> to vector<8x128xf32>
    %52 = arith.addf %48, %51 : vector<8x128xf32>
    %cst_42 = arith.constant 0.000000e+00 : f32
    %53 = vector.broadcast %cst_42 : f32 to vector<8x128xf32>
    %54 = arith.maximumf %52, %53 : vector<8x128xf32>
    %c6 = arith.constant 6 : index
    %c0_43 = arith.constant 0 : index
    %c0_44 = arith.constant 0 : index
    %55 = vector.load %arg2[%c6, %c0_43, %c0_44] : memref<10x128x128xf32, #tpu.memory_space<vmem>>, vector<1x128x128xf32>
    %56 = vector.shape_cast %55 : vector<1x128x128xf32> to vector<128x128xf32>
    %cst_45 = arith.constant dense<0.000000e+00> : vector<8x128xf32>
    %57 = tpu.matmul %54, %56, %cst_45 {dimension_numbers = #tpu.dot_dimension_numbers<[1], [0], [0], [1], [0, 0, 1, 1], [], []>} : vector<8x128xf32>, vector<128x128xf32>, vector<8x128xf32> -> vector<8x128xf32>
    %c6_46 = arith.constant 6 : index
    %c0_47 = arith.constant 0 : index
    %c0_48 = arith.constant 0 : index
    %58 = vector.load %arg3[%c6_46, %c0_47, %c0_48] : memref<10x1x128xf32, #tpu.memory_space<vmem>>, vector<1x1x128xf32>
    %59 = vector.shape_cast %58 : vector<1x1x128xf32> to vector<1x128xf32>
    %60 = vector.broadcast %59 : vector<1x128xf32> to vector<8x128xf32>
    %61 = arith.addf %57, %60 : vector<8x128xf32>
    %cst_49 = arith.constant 0.000000e+00 : f32
    %62 = vector.broadcast %cst_49 : f32 to vector<8x128xf32>
    %63 = arith.maximumf %61, %62 : vector<8x128xf32>
    %c7 = arith.constant 7 : index
    %c0_50 = arith.constant 0 : index
    %c0_51 = arith.constant 0 : index
    %64 = vector.load %arg2[%c7, %c0_50, %c0_51] : memref<10x128x128xf32, #tpu.memory_space<vmem>>, vector<1x128x128xf32>
    %65 = vector.shape_cast %64 : vector<1x128x128xf32> to vector<128x128xf32>
    %cst_52 = arith.constant dense<0.000000e+00> : vector<8x128xf32>
    %66 = tpu.matmul %63, %65, %cst_52 {dimension_numbers = #tpu.dot_dimension_numbers<[1], [0], [0], [1], [0, 0, 1, 1], [], []>} : vector<8x128xf32>, vector<128x128xf32>, vector<8x128xf32> -> vector<8x128xf32>
    %c7_53 = arith.constant 7 : index
    %c0_54 = arith.constant 0 : index
    %c0_55 = arith.constant 0 : index
    %67 = vector.load %arg3[%c7_53, %c0_54, %c0_55] : memref<10x1x128xf32, #tpu.memory_space<vmem>>, vector<1x1x128xf32>
    %68 = vector.shape_cast %67 : vector<1x1x128xf32> to vector<1x128xf32>
    %69 = vector.broadcast %68 : vector<1x128xf32> to vector<8x128xf32>
    %70 = arith.addf %66, %69 : vector<8x128xf32>
    %cst_56 = arith.constant 0.000000e+00 : f32
    %71 = vector.broadcast %cst_56 : f32 to vector<8x128xf32>
    %72 = arith.maximumf %70, %71 : vector<8x128xf32>
    %c8 = arith.constant 8 : index
    %c0_57 = arith.constant 0 : index
    %c0_58 = arith.constant 0 : index
    %73 = vector.load %arg2[%c8, %c0_57, %c0_58] : memref<10x128x128xf32, #tpu.memory_space<vmem>>, vector<1x128x128xf32>
    %74 = vector.shape_cast %73 : vector<1x128x128xf32> to vector<128x128xf32>
    %cst_59 = arith.constant dense<0.000000e+00> : vector<8x128xf32>
    %75 = tpu.matmul %72, %74, %cst_59 {dimension_numbers = #tpu.dot_dimension_numbers<[1], [0], [0], [1], [0, 0, 1, 1], [], []>} : vector<8x128xf32>, vector<128x128xf32>, vector<8x128xf32> -> vector<8x128xf32>
    %c8_60 = arith.constant 8 : index
    %c0_61 = arith.constant 0 : index
    %c0_62 = arith.constant 0 : index
    %76 = vector.load %arg3[%c8_60, %c0_61, %c0_62] : memref<10x1x128xf32, #tpu.memory_space<vmem>>, vector<1x1x128xf32>
    %77 = vector.shape_cast %76 : vector<1x1x128xf32> to vector<1x128xf32>
    %78 = vector.broadcast %77 : vector<1x128xf32> to vector<8x128xf32>
    %79 = arith.addf %75, %78 : vector<8x128xf32>
    %cst_63 = arith.constant 0.000000e+00 : f32
    %80 = vector.broadcast %cst_63 : f32 to vector<8x128xf32>
    %81 = arith.maximumf %79, %80 : vector<8x128xf32>
    %c9 = arith.constant 9 : index
    %c0_64 = arith.constant 0 : index
    %c0_65 = arith.constant 0 : index
    %82 = vector.load %arg2[%c9, %c0_64, %c0_65] : memref<10x128x128xf32, #tpu.memory_space<vmem>>, vector<1x128x128xf32>
    %83 = vector.shape_cast %82 : vector<1x128x128xf32> to vector<128x128xf32>
    %cst_66 = arith.constant dense<0.000000e+00> : vector<8x128xf32>
    %84 = tpu.matmul %81, %83, %cst_66 {dimension_numbers = #tpu.dot_dimension_numbers<[1], [0], [0], [1], [0, 0, 1, 1], [], []>} : vector<8x128xf32>, vector<128x128xf32>, vector<8x128xf32> -> vector<8x128xf32>
    %c9_67 = arith.constant 9 : index
    %c0_68 = arith.constant 0 : index
    %c0_69 = arith.constant 0 : index
    %85 = vector.load %arg3[%c9_67, %c0_68, %c0_69] : memref<10x1x128xf32, #tpu.memory_space<vmem>>, vector<1x1x128xf32>
    %86 = vector.shape_cast %85 : vector<1x1x128xf32> to vector<1x128xf32>
    %87 = vector.broadcast %86 : vector<1x128xf32> to vector<8x128xf32>
    %88 = arith.addf %84, %87 : vector<8x128xf32>
    %cst_70 = arith.constant 0.000000e+00 : f32
    %89 = vector.broadcast %cst_70 : f32 to vector<8x128xf32>
    %90 = arith.maximumf %88, %89 : vector<8x128xf32>
    %91 = arith.addf %0, %90 : vector<8x128xf32>
    %c0_71 = arith.constant 0 : index
    %c0_72 = arith.constant 0 : index
    %92 = vector.load %arg4[%c0_71, %c0_72] : memref<8x128xf32, #tpu.memory_space<vmem>>, vector<8x128xf32>
    tpu.vector_store %arg4[%c0_71, %c0_72], %91 {strides = array<i32>} : memref<8x128xf32, #tpu.memory_space<vmem>>, vector<8x128xf32>,
    return
  }
  func.func @transform_0(%arg0: i32) -> (i32, i32) {
    %c0_i32 = arith.constant 0 : i32
    %c0_i32_0 = arith.constant 0 : i32
    return %arg0, %c0_i32 : i32, i32
  }
  func.func @transform_1(%arg0: i32) -> (i32, i32, i32) {
    %c0_i32 = arith.constant 0 : i32
    %c0_i32_0 = arith.constant 0 : i32
    %c0_i32_1 = arith.constant 0 : i32
    %c0_i32_2 = arith.constant 0 : i32
    return %c0_i32, %c0_i32_0, %c0_i32_1 : i32, i32, i32
  }
  func.func @transform_2(%arg0: i32) -> (i32, i32, i32) {
    %c0_i32 = arith.constant 0 : i32
    %c0_i32_0 = arith.constant 0 : i32
    %c0_i32_1 = arith.constant 0 : i32
    %c0_i32_2 = arith.constant 0 : i32
    return %c0_i32, %c0_i32_0, %c0_i32_1 : i32, i32, i32
  }
  func.func @transform_3(%arg0: i32) -> (i32, i32) {
    %c0_i32 = arith.constant 0 : i32
    %c0_i32_0 = arith.constant 0 : i32
    return %arg0, %c0_i32 : i32, i32
  }
}

</mosaic_0001>

<llo_original>
// kernel: block_forward.1
$region0: #{block_forward.1}
  #allocation0 [shape = 'u32[]', space=smem, size = 0x4, offset = 0x4, fixed_abs, tag = 'smem constant byte address 0x4 - core index']
  #allocation1 [shape = 'u32[144,128]{1,0:T(1,128)}', space=vmem, size = 0x12000, scoped, tag = 'internal scratch']
  %s0 = inlined_call_operand.vmem [shape: f32[8,128], index: 0, kind: input, shape index: {}]
  %s1 = inlined_call_operand.vmem [shape: f32[10,128,128], index: 1, kind: input, shape index: {}]
  %s2 = inlined_call_operand.vmem [shape: f32[10,1,128], index: 2, kind: input, shape index: {}]
  %s3 = inlined_call_operand.vmem [shape: f32[8,128], index: 3, kind: output, shape index: {}]
  %s4 = sld [smem:[#allocation0]]
  $region22: #{block_forward.1} parent=0
    _
  %s6 = ssub.s32 1, %s4
  %s7 = scalar_select 0, %s6, %s4
  // Predicated region
  $region2: #{block_forward.1} parent=0 // pred_check
    _
  $region3: #{block_forward.1} parent=0 // pred_check_branch
    %9 = sbr.rel (0) target = $region5
  $region4: #{block_forward.1} parent=0 // pred_region
    _
  $region5: #{block_forward.1} parent=0 // pred_fallthru
    _
  // Predicated region
  $region6: #{block_forward.1} parent=0 // pred_check
    _
  $region7: #{block_forward.1} parent=0 // pred_check_branch
    %11 = sbr.rel (0) target = $region9
  $region8: #{block_forward.1} parent=0 // pred_region
    _
  $region9: #{block_forward.1} parent=0 // pred_fallthru
    _
  // Predicated region
  $region10: #{block_forward.1} parent=0 // pred_check
    _
  $region11: #{block_forward.1} parent=0 // pred_check_branch
    %13 = sbr.rel (0) target = $region13
  $region12: #{block_forward.1} parent=0 // pred_region
    _
  $region13: #{block_forward.1} parent=0 // pred_fallthru
    _
  %v14 = vld [vmem:[%s0] sm:$0xff]
  %v15 = vld [vmem:[%s1] sm:$0xff]
  %v16 = vld [vmem:[%s1 + $0x8] sm:$0xff]
  %v17 = vld [vmem:[%s1 + $0x10] sm:$0xff]
  %v18 = vld [vmem:[%s1 + $0x18] sm:$0xff]
  %v19 = vld [vmem:[%s1 + $0x20] sm:$0xff]
  %v20 = vld [vmem:[%s1 + $0x28] sm:$0xff]
  %v21 = vld [vmem:[%s1 + $0x30] sm:$0xff]
  %v22 = vld [vmem:[%s1 + $0x38] sm:$0xff]
  %v23 = vld [vmem:[%s1 + $0x40] sm:$0xff]
  %v24 = vld [vmem:[%s1 + $0x48] sm:$0xff]
  %v25 = vld [vmem:[%s1 + $0x50] sm:$0xff]
  %v26 = vld [vmem:[%s1 + $0x58] sm:$0xff]
  %v27 = vld [vmem:[%s1 + $0x60] sm:$0xff]
  %v28 = vld [vmem:[%s1 + $0x68] sm:$0xff]
  %v29 = vld [vmem:[%s1 + $0x70] sm:$0xff]
  %v30 = vld [vmem:[%s1 + $0x78] sm:$0xff]
  %v31 = vld [vmem:[%s2] sm:$0x1]
  %v33 = vlaneseq
  %v34 = vshrl.u32 %v33, 7
  %v35 = vsub.s32 0, %v34
  %v36 = vrot.slane %v31, %v35
  %38 = vmatprep.subr.mxu0 0.0
  %39 = vmatpush1.msra.mxu0 %v15
  %40 = vmatprep.subr.mxu0 0.0
  %41 = vmatpush1.msra.mxu0 %v16
  %42 = vmatprep.subr.mxu0 0.0
  %43 = vmatpush1.msra.mxu0 %v17
  %44 = vmatprep.subr.mxu0 0.0
  %45 = vmatpush1.msra.mxu0 %v18
  %46 = vmatprep.subr.mxu0 0.0
  %47 = vmatpush1.msra.mxu0 %v19
  %48 = vmatprep.subr.mxu0 0.0
  %49 = vmatpush1.msra.mxu0 %v20
  %50 = vmatprep.subr.mxu0 0.0
  %51 = vmatpush1.msra.mxu0 %v21
  %52 = vmatprep.subr.mxu0 0.0
  %53 = vmatpush1.msra.mxu0 %v22
  %54 = vmatprep.subr.mxu0 0.0
  %55 = vmatpush1.msra.mxu0 %v23
  %56 = vmatprep.subr.mxu0 0.0
  %57 = vmatpush1.msra.mxu0 %v24
  %58 = vmatprep.subr.mxu0 0.0
  %59 = vmatpush1.msra.mxu0 %v25
  %60 = vmatprep.subr.mxu0 0.0
  %61 = vmatpush1.msra.mxu0 %v26
  %62 = vmatprep.subr.mxu0 0.0
  %63 = vmatpush1.msra.mxu0 %v27
  %64 = vmatprep.subr.mxu0 0.0
  %65 = vmatpush1.msra.mxu0 %v28
  %66 = vmatprep.subr.mxu0 0.0
  %67 = vmatpush1.msra.mxu0 %v29
  %68 = vmatprep.subr.mxu0 0.0
  %69 = vmatpush1.msra.mxu0 %v30
  %70 = vmatprep.subr.mxu0 0.0
  %71 = vmatpush1.msra.mxu0 0.0
  %72 = vmatprep.subr.mxu0 0.0
  %73 = vmatpush1.msra.mxu0 0.0
  %74 = vmatprep.subr.mxu0 0.0
  %75 = vmatpush1.msra.mxu0 0.0
  %76 = vmatprep.subr.mxu0 0.0
  %77 = vmatpush1.msra.mxu0 0.0
  %78 = vmatprep.subr.mxu0 0.0
  %79 = vmatpush1.msra.mxu0 0.0
  %80 = vmatprep.subr.mxu0 0.0
  %81 = vmatpush1.msra.mxu0 0.0
  %82 = vmatprep.subr.mxu0 0.0
  %83 = vmatpush1.msra.mxu0 0.0
  %84 = vmatprep.subr.mxu0 0.0
  %85 = vmatpush1.msra.mxu0 0.0
  %86 = vmatprep.subr.mxu0 0.0
  %87 = vmatpush1.msra.mxu0 0.0
  %88 = vmatprep.subr.mxu0 0.0
  %89 = vmatpush1.msra.mxu0 0.0
  %90 = vmatprep.subr.mxu0 0.0
  %91 = vmatpush1.msra.mxu0 0.0
  %92 = vmatprep.subr.mxu0 0.0
  %93 = vmatpush1.msra.mxu0 0.0
  %94 = vmatprep.subr.mxu0 0.0
  %95 = vmatpush1.msra.mxu0 0.0
  %96 = vmatprep.subr.mxu0 0.0
  %97 = vmatpush1.msra.mxu0 0.0
  %98 = vmatprep.subr.mxu0 0.0
  %99 = vmatpush1.msra.mxu0 0.0
  %100 = vmatprep.subr.mxu0 0.0
  %101 = vmatpush1.msra.mxu0 0.0
  %102 = vmatprep.mubr.f32.mxu0 0.0
  %103 = vmatmul.mubr.f32.gmra.mrb[0].mxu0 %v14
  %v104 = vpop.f32.mrb[0].mxu0
  %v105 = vadd.f32 %v36, %v104
  %v106 = vpop.f32.mrb[0].mxu0
  %107 = vdwg.mxu0
  %v108 = vmax.f32 %v105, 0.0
  %s109 = scalar_lea.vmem %s1, 128
  %v110 = vld [vmem:[%s109] sm:$0xff]
  %v111 = vld [vmem:[%s109 + $0x8] sm:$0xff]
  %v112 = vld [vmem:[%s109 + $0x10] sm:$0xff]
  %v113 = vld [vmem:[%s109 + $0x18] sm:$0xff]
  %v114 = vld [vmem:[%s109 + $0x20] sm:$0xff]
  %v115 = vld [vmem:[%s109 + $0x28] sm:$0xff]
  %v116 = vld [vmem:[%s109 + $0x30] sm:$0xff]
  %v117 = vld [vmem:[%s109 + $0x38] sm:$0xff]
  %v118 = vld [vmem:[%s109 + $0x40] sm:$0xff]
  %v119 = vld [vmem:[%s109 + $0x48] sm:$0xff]
  %v120 = vld [vmem:[%s109 + $0x50] sm:$0xff]
  %v121 = vld [vmem:[%s109 + $0x58] sm:$0xff]
  %v122 = vld [vmem:[%s109 + $0x60] sm:$0xff]
  %v123 = vld [vmem:[%s109 + $0x68] sm:$0xff]
  %v124 = vld [vmem:[%s109 + $0x70] sm:$0xff]
  %v125 = vld [vmem:[%s109 + $0x78] sm:$0xff]
  %s126 = scalar_lea.vmem %s2, 1
  %v127 = vld [vmem:[%s126] sm:$0x1]
  %v129 = vlaneseq
  %v130 = vshrl.u32 %v129, 7
  %v131 = vsub.s32 0, %v130
  %v132 = vrot.slane %v127, %v131
  %134 = vmatprep.subr.mxu0 0.0
  %135 = vmatpush1.msra.mxu0 %v110
  %136 = vmatprep.subr.mxu0 0.0
  %137 = vmatpush1.msra.mxu0 %v111
  %138 = vmatprep.subr.mxu0 0.0
  %139 = vmatpush1.msra.mxu0 %v112
  %140 = vmatprep.subr.mxu0 0.0
  %141 = vmatpush1.msra.mxu0 %v113
  %142 = vmatprep.subr.mxu0 0.0
  %143 = vmatpush1.msra.mxu0 %v114
  %144 = vmatprep.subr.mxu0 0.0
  %145 = vmatpush1.msra.mxu0 %v115
  %146 = vmatprep.subr.mxu0 0.0
  %147 = vmatpush1.msra.mxu0 %v116
  %148 = vmatprep.subr.mxu0 0.0
  %149 = vmatpush1.msra.mxu0 %v117
  %150 = vmatprep.subr.mxu0 0.0
  %151 = vmatpush1.msra.mxu0 %v118
  %152 = vmatprep.subr.mxu0 0.0
  %153 = vmatpush1.msra.mxu0 %v119
  %154 = vmatprep.subr.mxu0 0.0
  %155 = vmatpush1.msra.mxu0 %v120
  %156 = vmatprep.subr.mxu0 0.0
  %157 = vmatpush1.msra.mxu0 %v121
  %158 = vmatprep.subr.mxu0 0.0
  %159 = vmatpush1.msra.mxu0 %v122
  %160 = vmatprep.subr.mxu0 0.0
  %161 = vmatpush1.msra.mxu0 %v123
  %162 = vmatprep.subr.mxu0 0.0
  %163 = vmatpush1.msra.mxu0 %v124
  %164 = vmatprep.subr.mxu0 0.0
  %165 = vmatpush1.msra.mxu0 %v125
  %166 = vmatprep.subr.mxu0 0.0
  %167 = vmatpush1.msra.mxu0 0.0
  %168 = vmatprep.subr.mxu0 0.0
  %169 = vmatpush1.msra.mxu0 0.0
  %170 = vmatprep.subr.mxu0 0.0
  %171 = vmatpush1.msra.mxu0 0.0
  %172 = vmatprep.subr.mxu0 0.0
  %173 = vmatpush1.msra.mxu0 0.0
  %174 = vmatprep.subr.mxu0 0.0
  %175 = vmatpush1.msra.mxu0 0.0
  %176 = vmatprep.subr.mxu0 0.0
  %177 = vmatpush1.msra.mxu0 0.0
  %178 = vmatprep.subr.mxu0 0.0
  %179 = vmatpush1.msra.mxu0 0.0
  %180 = vmatprep.subr.mxu0 0.0
  %181 = vmatpush1.msra.mxu0 0.0
  %182 = vmatprep.subr.mxu0 0.0
  %183 = vmatpush1.msra.mxu0 0.0
  %184 = vmatprep.subr.mxu0 0.0
  %185 = vmatpush1.msra.mxu0 0.0
  %186 = vmatprep.subr.mxu0 0.0
  %187 = vmatpush1.msra.mxu0 0.0
  %188 = vmatprep.subr.mxu0 0.0
  %189 = vmatpush1.msra.mxu0 0.0
  %190 = vmatprep.subr.mxu0 0.0
  %191 = vmatpush1.msra.mxu0 0.0
  %192 = vmatprep.subr.mxu0 0.0
  %193 = vmatpush1.msra.mxu0 0.0
  %194 = vmatprep.subr.mxu0 0.0
  %195 = vmatpush1.msra.mxu0 0.0
  %196 = vmatprep.subr.mxu0 0.0
  %197 = vmatpush1.msra.mxu0 0.0
  %198 = vmatprep.mubr.f32.mxu0 0.0
  %199 = vmatmul.mubr.f32.gmra.mrb[0].mxu0 %v108
  %v200 = vpop.f32.mrb[0].mxu0
  %v201 = vadd.f32 %v132, %v200
  %v202 = vpop.f32.mrb[0].mxu0
  %203 = vdwg.mxu0
  %v204 = vmax.f32 %v201, 0.0
  %s205 = scalar_lea.vmem %s1, 256
  %v206 = vld [vmem:[%s205] sm:$0xff]
  %v207 = vld [vmem:[%s205 + $0x8] sm:$0xff]
  %v208 = vld [vmem:[%s205 + $0x10] sm:$0xff]
  %v209 = vld [vmem:[%s205 + $0x18] sm:$0xff]
  %v210 = vld [vmem:[%s205 + $0x20] sm:$0xff]
  %v211 = vld [vmem:[%s205 + $0x28] sm:$0xff]
  %v212 = vld [vmem:[%s205 + $0x30] sm:$0xff]
  %v213 = vld [vmem:[%s205 + $0x38] sm:$0xff]
  %v214 = vld [vmem:[%s205 + $0x40] sm:$0xff]
  %v215 = vld [vmem:[%s205 + $0x48] sm:$0xff]
  %v216 = vld [vmem:[%s205 + $0x50] sm:$0xff]
  %v217 = vld [vmem:[%s205 + $0x58] sm:$0xff]
  %v218 = vld [vmem:[%s205 + $0x60] sm:$0xff]
  %v219 = vld [vmem:[%s205 + $0x68] sm:$0xff]
  %v220 = vld [vmem:[%s205 + $0x70] sm:$0xff]
  %v221 = vld [vmem:[%s205 + $0x78] sm:$0xff]
  %s222 = scalar_lea.vmem %s2, 2
  %v223 = vld [vmem:[%s222] sm:$0x1]
  %v225 = vlaneseq
  %v226 = vshrl.u32 %v225, 7
  %v227 = vsub.s32 0, %v226
  %v228 = vrot.slane %v223, %v227
  %230 = vmatprep.subr.mxu0 0.0
  %231 = vmatpush1.msra.mxu0 %v206
  %232 = vmatprep.subr.mxu0 0.0
  %233 = vmatpush1.msra.mxu0 %v207
  %234 = vmatprep.subr.mxu0 0.0
  %235 = vmatpush1.msra.mxu0 %v208
  %236 = vmatprep.subr.mxu0 0.0
  %237 = vmatpush1.msra.mxu0 %v209
  %238 = vmatprep.subr.mxu0 0.0
  %239 = vmatpush1.msra.mxu0 %v210
  %240 = vmatprep.subr.mxu0 0.0
  %241 = vmatpush1.msra.mxu0 %v211
  %242 = vmatprep.subr.mxu0 0.0
  %243 = vmatpush1.msra.mxu0 %v212
  %244 = vmatprep.subr.mxu0 0.0
  %245 = vmatpush1.msra.mxu0 %v213
  %246 = vmatprep.subr.mxu0 0.0
  %247 = vmatpush1.msra.mxu0 %v214
  %248 = vmatprep.subr.mxu0 0.0
  %249 = vmatpush1.msra.mxu0 %v215
  %250 = vmatprep.subr.mxu0 0.0
  %251 = vmatpush1.msra.mxu0 %v216
  %252 = vmatprep.subr.mxu0 0.0
  %253 = vmatpush1.msra.mxu0 %v217
  %254 = vmatprep.subr.mxu0 0.0
  %255 = vmatpush1.msra.mxu0 %v218
  %256 = vmatprep.subr.mxu0 0.0
  %257 = vmatpush1.msra.mxu0 %v219
  %258 = vmatprep.subr.mxu0 0.0
  %259 = vmatpush1.msra.mxu0 %v220
  %260 = vmatprep.subr.mxu0 0.0
  %261 = vmatpush1.msra.mxu0 %v221
  %262 = vmatprep.subr.mxu0 0.0
  %263 = vmatpush1.msra.mxu0 0.0
  %264 = vmatprep.subr.mxu0 0.0
  %265 = vmatpush1.msra.mxu0 0.0
  %266 = vmatprep.subr.mxu0 0.0
  %267 = vmatpush1.msra.mxu0 0.0
  %268 = vmatprep.subr.mxu0 0.0
  %269 = vmatpush1.msra.mxu0 0.0
  %270 = vmatprep.subr.mxu0 0.0
  %271 = vmatpush1.msra.mxu0 0.0
  %272 = vmatprep.subr.mxu0 0.0
  %273 = vmatpush1.msra.mxu0 0.0
  %274 = vmatprep.subr.mxu0 0.0
  %275 = vmatpush1.msra.mxu0 0.0
  %276 = vmatprep.subr.mxu0 0.0
  %277 = vmatpush1.msra.mxu0 0.0
  %278 = vmatprep.subr.mxu0 0.0
  %279 = vmatpush1.msra.mxu0 0.0
  %280 = vmatprep.subr.mxu0 0.0
  %281 = vmatpush1.msra.mxu0 0.0
  %282 = vmatprep.subr.mxu0 0.0
  %283 = vmatpush1.msra.mxu0 0.0
  %284 = vmatprep.subr.mxu0 0.0
  %285 = vmatpush1.msra.mxu0 0.0
  %286 = vmatprep.subr.mxu0 0.0
  %287 = vmatpush1.msra.mxu0 0.0
  %288 = vmatprep.subr.mxu0 0.0
  %289 = vmatpush1.msra.mxu0 0.0
  %290 = vmatprep.subr.mxu0 0.0
  %291 = vmatpush1.msra.mxu0 0.0
  %292 = vmatprep.subr.mxu0 0.0
  %293 = vmatpush1.msra.mxu0 0.0
  %294 = vmatprep.mubr.f32.mxu0 0.0
  %295 = vmatmul.mubr.f32.gmra.mrb[0].mxu0 %v204
  %v296 = vpop.f32.mrb[0].mxu0
  %v297 = vadd.f32 %v228, %v296
  %v298 = vpop.f32.mrb[0].mxu0
  %299 = vdwg.mxu0
  %v300 = vmax.f32 %v297, 0.0
  %s301 = scalar_lea.vmem %s1, 384
  %v302 = vld [vmem:[%s301] sm:$0xff]
  %v303 = vld [vmem:[%s301 + $0x8] sm:$0xff]
  %v304 = vld [vmem:[%s301 + $0x10] sm:$0xff]
  %v305 = vld [vmem:[%s301 + $0x18] sm:$0xff]
  %v306 = vld [vmem:[%s301 + $0x20] sm:$0xff]
  %v307 = vld [vmem:[%s301 + $0x28] sm:$0xff]
  %v308 = vld [vmem:[%s301 + $0x30] sm:$0xff]
  %v309 = vld [vmem:[%s301 + $0x38] sm:$0xff]
  %v310 = vld [vmem:[%s301 + $0x40] sm:$0xff]
  %v311 = vld [vmem:[%s301 + $0x48] sm:$0xff]
  %v312 = vld [vmem:[%s301 + $0x50] sm:$0xff]
  %v313 = vld [vmem:[%s301 + $0x58] sm:$0xff]
  %v314 = vld [vmem:[%s301 + $0x60] sm:$0xff]
  %v315 = vld [vmem:[%s301 + $0x68] sm:$0xff]
  %v316 = vld [vmem:[%s301 + $0x70] sm:$0xff]
  %v317 = vld [vmem:[%s301 + $0x78] sm:$0xff]
  %s318 = scalar_lea.vmem %s2, 3
  %v319 = vld [vmem:[%s318] sm:$0x1]
  %v321 = vlaneseq
  %v322 = vshrl.u32 %v321, 7
  %v323 = vsub.s32 0, %v322
  %v324 = vrot.slane %v319, %v323
  %326 = vmatprep.subr.mxu0 0.0
  %327 = vmatpush1.msra.mxu0 %v302
  %328 = vmatprep.subr.mxu0 0.0
  %329 = vmatpush1.msra.mxu0 %v303
  %330 = vmatprep.subr.mxu0 0.0
  %331 = vmatpush1.msra.mxu0 %v304
  %332 = vmatprep.subr.mxu0 0.0
  %333 = vmatpush1.msra.mxu0 %v305
  %334 = vmatprep.subr.mxu0 0.0
  %335 = vmatpush1.msra.mxu0 %v306
  %336 = vmatprep.subr.mxu0 0.0
  %337 = vmatpush1.msra.mxu0 %v307
  %338 = vmatprep.subr.mxu0 0.0
  %339 = vmatpush1.msra.mxu0 %v308
  %340 = vmatprep.subr.mxu0 0.0
  %341 = vmatpush1.msra.mxu0 %v309
  %342 = vmatprep.subr.mxu0 0.0
  %343 = vmatpush1.msra.mxu0 %v310
  %344 = vmatprep.subr.mxu0 0.0
  %345 = vmatpush1.msra.mxu0 %v311
  %346 = vmatprep.subr.mxu0 0.0
  %347 = vmatpush1.msra.mxu0 %v312
  %348 = vmatprep.subr.mxu0 0.0
  %349 = vmatpush1.msra.mxu0 %v313
  %350 = vmatprep.subr.mxu0 0.0
  %351 = vmatpush1.msra.mxu0 %v314
  %352 = vmatprep.subr.mxu0 0.0
  %353 = vmatpush1.msra.mxu0 %v315
  %354 = vmatprep.subr.mxu0 0.0
  %355 = vmatpush1.msra.mxu0 %v316
  %356 = vmatprep.subr.mxu0 0.0
  %357 = vmatpush1.msra.mxu0 %v317
  %358 = vmatprep.subr.mxu0 0.0
  %359 = vmatpush1.msra.mxu0 0.0
  %360 = vmatprep.subr.mxu0 0.0
  %361 = vmatpush1.msra.mxu0 0.0
  %362 = vmatprep.subr.mxu0 0.0
  %363 = vmatpush1.msra.mxu0 0.0
  %364 = vmatprep.subr.mxu0 0.0
  %365 = vmatpush1.msra.mxu0 0.0
  %366 = vmatprep.subr.mxu0 0.0
  %367 = vmatpush1.msra.mxu0 0.0
  %368 = vmatprep.subr.mxu0 0.0
  %369 = vmatpush1.msra.mxu0 0.0
  %370 = vmatprep.subr.mxu0 0.0
  %371 = vmatpush1.msra.mxu0 0.0
  %372 = vmatprep.subr.mxu0 0.0
  %373 = vmatpush1.msra.mxu0 0.0
  %374 = vmatprep.subr.mxu0 0.0
  %375 = vmatpush1.msra.mxu0 0.0
  %376 = vmatprep.subr.mxu0 0.0
  %377 = vmatpush1.msra.mxu0 0.0
  %378 = vmatprep.subr.mxu0 0.0
  %379 = vmatpush1.msra.mxu0 0.0
  %380 = vmatprep.subr.mxu0 0.0
  %381 = vmatpush1.msra.mxu0 0.0
  %382 = vmatprep.subr.mxu0 0.0
  %383 = vmatpush1.msra.mxu0 0.0
  %384 = vmatprep.subr.mxu0 0.0
  %385 = vmatpush1.msra.mxu0 0.0
  %386 = vmatprep.subr.mxu0 0.0
  %387 = vmatpush1.msra.mxu0 0.0
  %388 = vmatprep.subr.mxu0 0.0
  %389 = vmatpush1.msra.mxu0 0.0
  %390 = vmatprep.mubr.f32.mxu0 0.0
  %391 = vmatmul.mubr.f32.gmra.mrb[0].mxu0 %v300
  %v392 = vpop.f32.mrb[0].mxu0
  %v393 = vadd.f32 %v324, %v392
  %v394 = vpop.f32.mrb[0].mxu0
  %395 = vdwg.mxu0
  %v396 = vmax.f32 %v393, 0.0
  %s397 = scalar_lea.vmem %s1, 512
  %v398 = vld [vmem:[%s397] sm:$0xff]
  %v399 = vld [vmem:[%s397 + $0x8] sm:$0xff]
  %v400 = vld [vmem:[%s397 + $0x10] sm:$0xff]
  %v401 = vld [vmem:[%s397 + $0x18] sm:$0xff]
  %v402 = vld [vmem:[%s397 + $0x20] sm:$0xff]
  %v403 = vld [vmem:[%s397 + $0x28] sm:$0xff]
  %v404 = vld [vmem:[%s397 + $0x30] sm:$0xff]
  %v405 = vld [vmem:[%s397 + $0x38] sm:$0xff]
  %v406 = vld [vmem:[%s397 + $0x40] sm:$0xff]
  %v407 = vld [vmem:[%s397 + $0x48] sm:$0xff]
  %v408 = vld [vmem:[%s397 + $0x50] sm:$0xff]
  %v409 = vld [vmem:[%s397 + $0x58] sm:$0xff]
  %v410 = vld [vmem:[%s397 + $0x60] sm:$0xff]
  %v411 = vld [vmem:[%s397 + $0x68] sm:$0xff]
  %v412 = vld [vmem:[%s397 + $0x70] sm:$0xff]
  %v413 = vld [vmem:[%s397 + $0x78] sm:$0xff]
  %s414 = scalar_lea.vmem %s2, 4
  %v415 = vld [vmem:[%s414] sm:$0x1]
  %v417 = vlaneseq
  %v418 = vshrl.u32 %v417, 7
  %v419 = vsub.s32 0, %v418
  %v420 = vrot.slane %v415, %v419
  %422 = vmatprep.subr.mxu0 0.0
  %423 = vmatpush1.msra.mxu0 %v398
  %424 = vmatprep.subr.mxu0 0.0
  %425 = vmatpush1.msra.mxu0 %v399
  %426 = vmatprep.subr.mxu0 0.0
  %427 = vmatpush1.msra.mxu0 %v400
  %428 = vmatprep.subr.mxu0 0.0
  %429 = vmatpush1.msra.mxu0 %v401
  %430 = vmatprep.subr.mxu0 0.0
  %431 = vmatpush1.msra.mxu0 %v402
  %432 = vmatprep.subr.mxu0 0.0
  %433 = vmatpush1.msra.mxu0 %v403
  %434 = vmatprep.subr.mxu0 0.0
  %435 = vmatpush1.msra.mxu0 %v404
  %436 = vmatprep.subr.mxu0 0.0
  %437 = vmatpush1.msra.mxu0 %v405
  %438 = vmatprep.subr.mxu0 0.0
  %439 = vmatpush1.msra.mxu0 %v406
  %440 = vmatprep.subr.mxu0 0.0
  %441 = vmatpush1.msra.mxu0 %v407
  %442 = vmatprep.subr.mxu0 0.0
  %443 = vmatpush1.msra.mxu0 %v408
  %444 = vmatprep.subr.mxu0 0.0
  %445 = vmatpush1.msra.mxu0 %v409
  %446 = vmatprep.subr.mxu0 0.0
  %447 = vmatpush1.msra.mxu0 %v410
  %448 = vmatprep.subr.mxu0 0.0
  %449 = vmatpush1.msra.mxu0 %v411
  %450 = vmatprep.subr.mxu0 0.0
  %451 = vmatpush1.msra.mxu0 %v412
  %452 = vmatprep.subr.mxu0 0.0
  %453 = vmatpush1.msra.mxu0 %v413
  %454 = vmatprep.subr.mxu0 0.0
  %455 = vmatpush1.msra.mxu0 0.0
  %456 = vmatprep.subr.mxu0 0.0
  %457 = vmatpush1.msra.mxu0 0.0
  %458 = vmatprep.subr.mxu0 0.0
  %459 = vmatpush1.msra.mxu0 0.0
  %460 = vmatprep.subr.mxu0 0.0
  %461 = vmatpush1.msra.mxu0 0.0
  %462 = vmatprep.subr.mxu0 0.0
  %463 = vmatpush1.msra.mxu0 0.0
  %464 = vmatprep.subr.mxu0 0.0
  %465 = vmatpush1.msra.mxu0 0.0
  %466 = vmatprep.subr.mxu0 0.0
  %467 = vmatpush1.msra.mxu0 0.0
  %468 = vmatprep.subr.mxu0 0.0
  %469 = vmatpush1.msra.mxu0 0.0
  %470 = vmatprep.subr.mxu0 0.0
  %471 = vmatpush1.msra.mxu0 0.0
  %472 = vmatprep.subr.mxu0 0.0
  %473 = vmatpush1.msra.mxu0 0.0
  %474 = vmatprep.subr.mxu0 0.0
  %475 = vmatpush1.msra.mxu0 0.0
  %476 = vmatprep.subr.mxu0 0.0
  %477 = vmatpush1.msra.mxu0 0.0
  %478 = vmatprep.subr.mxu0 0.0
  %479 = vmatpush1.msra.mxu0 0.0
  %480 = vmatprep.subr.mxu0 0.0
  %481 = vmatpush1.msra.mxu0 0.0
  %482 = vmatprep.subr.mxu0 0.0
  %483 = vmatpush1.msra.mxu0 0.0
  %484 = vmatprep.subr.mxu0 0.0
  %485 = vmatpush1.msra.mxu0 0.0
  %486 = vmatprep.mubr.f32.mxu0 0.0
  %487 = vmatmul.mubr.f32.gmra.mrb[0].mxu0 %v396
  %v488 = vpop.f32.mrb[0].mxu0
  %v489 = vadd.f32 %v420, %v488
  %v490 = vpop.f32.mrb[0].mxu0
  %491 = vdwg.mxu0
  %v492 = vmax.f32 %v489, 0.0
  %s493 = scalar_lea.vmem %s1, 640
  %v494 = vld [vmem:[%s493] sm:$0xff]
  %v495 = vld [vmem:[%s493 + $0x8] sm:$0xff]
  %v496 = vld [vmem:[%s493 + $0x10] sm:$0xff]
  %v497 = vld [vmem:[%s493 + $0x18] sm:$0xff]
  %v498 = vld [vmem:[%s493 + $0x20] sm:$0xff]
  %v499 = vld [vmem:[%s493 + $0x28] sm:$0xff]
  %v500 = vld [vmem:[%s493 + $0x30] sm:$0xff]
  %v501 = vld [vmem:[%s493 + $0x38] sm:$0xff]
  %v502 = vld [vmem:[%s493 + $0x40] sm:$0xff]
  %v503 = vld [vmem:[%s493 + $0x48] sm:$0xff]
  %v504 = vld [vmem:[%s493 + $0x50] sm:$0xff]
  %v505 = vld [vmem:[%s493 + $0x58] sm:$0xff]
  %v506 = vld [vmem:[%s493 + $0x60] sm:$0xff]
  %v507 = vld [vmem:[%s493 + $0x68] sm:$0xff]
  %v508 = vld [vmem:[%s493 + $0x70] sm:$0xff]
  %v509 = vld [vmem:[%s493 + $0x78] sm:$0xff]
  %s510 = scalar_lea.vmem %s2, 5
  %v511 = vld [vmem:[%s510] sm:$0x1]
  %v513 = vlaneseq
  %v514 = vshrl.u32 %v513, 7
  %v515 = vsub.s32 0, %v514
  %v516 = vrot.slane %v511, %v515
  %518 = vmatprep.subr.mxu0 0.0
  %519 = vmatpush1.msra.mxu0 %v494
  %520 = vmatprep.subr.mxu0 0.0
  %521 = vmatpush1.msra.mxu0 %v495
  %522 = vmatprep.subr.mxu0 0.0
  %523 = vmatpush1.msra.mxu0 %v496
  %524 = vmatprep.subr.mxu0 0.0
  %525 = vmatpush1.msra.mxu0 %v497
  %526 = vmatprep.subr.mxu0 0.0
  %527 = vmatpush1.msra.mxu0 %v498
  %528 = vmatprep.subr.mxu0 0.0
  %529 = vmatpush1.msra.mxu0 %v499
  %530 = vmatprep.subr.mxu0 0.0
  %531 = vmatpush1.msra.mxu0 %v500
  %532 = vmatprep.subr.mxu0 0.0
  %533 = vmatpush1.msra.mxu0 %v501
  %534 = vmatprep.subr.mxu0 0.0
  %535 = vmatpush1.msra.mxu0 %v502
  %536 = vmatprep.subr.mxu0 0.0
  %537 = vmatpush1.msra.mxu0 %v503
  %538 = vmatprep.subr.mxu0 0.0
  %539 = vmatpush1.msra.mxu0 %v504
  %540 = vmatprep.subr.mxu0 0.0
  %541 = vmatpush1.msra.mxu0 %v505
  %542 = vmatprep.subr.mxu0 0.0
  %543 = vmatpush1.msra.mxu0 %v506
  %544 = vmatprep.subr.mxu0 0.0
  %545 = vmatpush1.msra.mxu0 %v507
  %546 = vmatprep.subr.mxu0 0.0
  %547 = vmatpush1.msra.mxu0 %v508
  %548 = vmatprep.subr.mxu0 0.0
  %549 = vmatpush1.msra.mxu0 %v509
  %550 = vmatprep.subr.mxu0 0.0
  %551 = vmatpush1.msra.mxu0 0.0
  %552 = vmatprep.subr.mxu0 0.0
  %553 = vmatpush1.msra.mxu0 0.0
  %554 = vmatprep.subr.mxu0 0.0
  %555 = vmatpush1.msra.mxu0 0.0
  %556 = vmatprep.subr.mxu0 0.0
  %557 = vmatpush1.msra.mxu0 0.0
  %558 = vmatprep.subr.mxu0 0.0
  %559 = vmatpush1.msra.mxu0 0.0
  %560 = vmatprep.subr.mxu0 0.0
  %561 = vmatpush1.msra.mxu0 0.0
  %562 = vmatprep.subr.mxu0 0.0
  %563 = vmatpush1.msra.mxu0 0.0
  %564 = vmatprep.subr.mxu0 0.0
  %565 = vmatpush1.msra.mxu0 0.0
  %566 = vmatprep.subr.mxu0 0.0
  %567 = vmatpush1.msra.mxu0 0.0
  %568 = vmatprep.subr.mxu0 0.0
  %569 = vmatpush1.msra.mxu0 0.0
  %570 = vmatprep.subr.mxu0 0.0
  %571 = vmatpush1.msra.mxu0 0.0
  %572 = vmatprep.subr.mxu0 0.0
  %573 = vmatpush1.msra.mxu0 0.0
  %574 = vmatprep.subr.mxu0 0.0
  %575 = vmatpush1.msra.mxu0 0.0
  %576 = vmatprep.subr.mxu0 0.0
  %577 = vmatpush1.msra.mxu0 0.0
  %578 = vmatprep.subr.mxu0 0.0
  %579 = vmatpush1.msra.mxu0 0.0
  %580 = vmatprep.subr.mxu0 0.0
  %581 = vmatpush1.msra.mxu0 0.0
  %582 = vmatprep.mubr.f32.mxu0 0.0
  %583 = vmatmul.mubr.f32.gmra.mrb[0].mxu0 %v492
  %v584 = vpop.f32.mrb[0].mxu0
  %v585 = vadd.f32 %v516, %v584
  %v586 = vpop.f32.mrb[0].mxu0
  %587 = vdwg.mxu0
  %v588 = vmax.f32 %v585, 0.0
  %s589 = scalar_lea.vmem %s1, 768
  %v590 = vld [vmem:[%s589] sm:$0xff]
  %v591 = vld [vmem:[%s589 + $0x8] sm:$0xff]
  %v592 = vld [vmem:[%s589 + $0x10] sm:$0xff]
  %v593 = vld [vmem:[%s589 + $0x18] sm:$0xff]
  %v594 = vld [vmem:[%s589 + $0x20] sm:$0xff]
  %v595 = vld [vmem:[%s589 + $0x28] sm:$0xff]
  %v596 = vld [vmem:[%s589 + $0x30] sm:$0xff]
  %v597 = vld [vmem:[%s589 + $0x38] sm:$0xff]
  %v598 = vld [vmem:[%s589 + $0x40] sm:$0xff]
  %v599 = vld [vmem:[%s589 + $0x48] sm:$0xff]
  %v600 = vld [vmem:[%s589 + $0x50] sm:$0xff]
  %v601 = vld [vmem:[%s589 + $0x58] sm:$0xff]
  %v602 = vld [vmem:[%s589 + $0x60] sm:$0xff]
  %v603 = vld [vmem:[%s589 + $0x68] sm:$0xff]
  %v604 = vld [vmem:[%s589 + $0x70] sm:$0xff]
  %v605 = vld [vmem:[%s589 + $0x78] sm:$0xff]
  %s606 = scalar_lea.vmem %s2, 6
  %v607 = vld [vmem:[%s606] sm:$0x1]
  %v609 = vlaneseq
  %v610 = vshrl.u32 %v609, 7
  %v611 = vsub.s32 0, %v610
  %v612 = vrot.slane %v607, %v611
  %614 = vmatprep.subr.mxu0 0.0
  %615 = vmatpush1.msra.mxu0 %v590
  %616 = vmatprep.subr.mxu0 0.0
  %617 = vmatpush1.msra.mxu0 %v591
  %618 = vmatprep.subr.mxu0 0.0
  %619 = vmatpush1.msra.mxu0 %v592
  %620 = vmatprep.subr.mxu0 0.0
  %621 = vmatpush1.msra.mxu0 %v593
  %622 = vmatprep.subr.mxu0 0.0
  %623 = vmatpush1.msra.mxu0 %v594
  %624 = vmatprep.subr.mxu0 0.0
  %625 = vmatpush1.msra.mxu0 %v595
  %626 = vmatprep.subr.mxu0 0.0
  %627 = vmatpush1.msra.mxu0 %v596
  %628 = vmatprep.subr.mxu0 0.0
  %629 = vmatpush1.msra.mxu0 %v597
  %630 = vmatprep.subr.mxu0 0.0
  %631 = vmatpush1.msra.mxu0 %v598
  %632 = vmatprep.subr.mxu0 0.0
  %633 = vmatpush1.msra.mxu0 %v599
  %634 = vmatprep.subr.mxu0 0.0
  %635 = vmatpush1.msra.mxu0 %v600
  %636 = vmatprep.subr.mxu0 0.0
  %637 = vmatpush1.msra.mxu0 %v601
  %638 = vmatprep.subr.mxu0 0.0
  %639 = vmatpush1.msra.mxu0 %v602
  %640 = vmatprep.subr.mxu0 0.0
  %641 = vmatpush1.msra.mxu0 %v603
  %642 = vmatprep.subr.mxu0 0.0
  %643 = vmatpush1.msra.mxu0 %v604
  %644 = vmatprep.subr.mxu0 0.0
  %645 = vmatpush1.msra.mxu0 %v605
  %646 = vmatprep.subr.mxu0 0.0
  %647 = vmatpush1.msra.mxu0 0.0
  %648 = vmatprep.subr.mxu0 0.0
  %649 = vmatpush1.msra.mxu0 0.0
  %650 = vmatprep.subr.mxu0 0.0
  %651 = vmatpush1.msra.mxu0 0.0
  %652 = vmatprep.subr.mxu0 0.0
  %653 = vmatpush1.msra.mxu0 0.0
  %654 = vmatprep.subr.mxu0 0.0
  %655 = vmatpush1.msra.mxu0 0.0
  %656 = vmatprep.subr.mxu0 0.0
  %657 = vmatpush1.msra.mxu0 0.0
  %658 = vmatprep.subr.mxu0 0.0
  %659 = vmatpush1.msra.mxu0 0.0
  %660 = vmatprep.subr.mxu0 0.0
  %661 = vmatpush1.msra.mxu0 0.0
  %662 = vmatprep.subr.mxu0 0.0
  %663 = vmatpush1.msra.mxu0 0.0
  %664 = vmatprep.subr.mxu0 0.0
  %665 = vmatpush1.msra.mxu0 0.0
  %666 = vmatprep.subr.mxu0 0.0
  %667 = vmatpush1.msra.mxu0 0.0
  %668 = vmatprep.subr.mxu0 0.0
  %669 = vmatpush1.msra.mxu0 0.0
  %670 = vmatprep.subr.mxu0 0.0
  %671 = vmatpush1.msra.mxu0 0.0
  %672 = vmatprep.subr.mxu0 0.0
  %673 = vmatpush1.msra.mxu0 0.0
  %674 = vmatprep.subr.mxu0 0.0
  %675 = vmatpush1.msra.mxu0 0.0
  %676 = vmatprep.subr.mxu0 0.0
  %677 = vmatpush1.msra.mxu0 0.0
  %678 = vmatprep.mubr.f32.mxu0 0.0
  %679 = vmatmul.mubr.f32.gmra.mrb[0].mxu0 %v588
  %v680 = vpop.f32.mrb[0].mxu0
  %v681 = vadd.f32 %v612, %v680
  %v682 = vpop.f32.mrb[0].mxu0
  %683 = vdwg.mxu0
  %v684 = vmax.f32 %v681, 0.0
  %s685 = scalar_lea.vmem %s1, 896
  %v686 = vld [vmem:[%s685] sm:$0xff]
  %v687 = vld [vmem:[%s685 + $0x8] sm:$0xff]
  %v688 = vld [vmem:[%s685 + $0x10] sm:$0xff]
  %v689 = vld [vmem:[%s685 + $0x18] sm:$0xff]
  %v690 = vld [vmem:[%s685 + $0x20] sm:$0xff]
  %v691 = vld [vmem:[%s685 + $0x28] sm:$0xff]
  %v692 = vld [vmem:[%s685 + $0x30] sm:$0xff]
  %v693 = vld [vmem:[%s685 + $0x38] sm:$0xff]
  %v694 = vld [vmem:[%s685 + $0x40] sm:$0xff]
  %v695 = vld [vmem:[%s685 + $0x48] sm:$0xff]
  %v696 = vld [vmem:[%s685 + $0x50] sm:$0xff]
  %v697 = vld [vmem:[%s685 + $0x58] sm:$0xff]
  %v698 = vld [vmem:[%s685 + $0x60] sm:$0xff]
  %v699 = vld [vmem:[%s685 + $0x68] sm:$0xff]
  %v700 = vld [vmem:[%s685 + $0x70] sm:$0xff]
  %v701 = vld [vmem:[%s685 + $0x78] sm:$0xff]
  %s702 = scalar_lea.vmem %s2, 7
  %v703 = vld [vmem:[%s702] sm:$0x1]
  %v705 = vlaneseq
  %v706 = vshrl.u32 %v705, 7
  %v707 = vsub.s32 0, %v706
  %v708 = vrot.slane %v703, %v707
  %710 = vmatprep.subr.mxu0 0.0
  %711 = vmatpush1.msra.mxu0 %v686
  %712 = vmatprep.subr.mxu0 0.0
  %713 = vmatpush1.msra.mxu0 %v687
  %714 = vmatprep.subr.mxu0 0.0
  %715 = vmatpush1.msra.mxu0 %v688
  %716 = vmatprep.subr.mxu0 0.0
  %717 = vmatpush1.msra.mxu0 %v689
  %718 = vmatprep.subr.mxu0 0.0
  %719 = vmatpush1.msra.mxu0 %v690
  %720 = vmatprep.subr.mxu0 0.0
  %721 = vmatpush1.msra.mxu0 %v691
  %722 = vmatprep.subr.mxu0 0.0
  %723 = vmatpush1.msra.mxu0 %v692
  %724 = vmatprep.subr.mxu0 0.0
  %725 = vmatpush1.msra.mxu0 %v693
  %726 = vmatprep.subr.mxu0 0.0
  %727 = vmatpush1.msra.mxu0 %v694
  %728 = vmatprep.subr.mxu0 0.0
  %729 = vmatpush1.msra.mxu0 %v695
  %730 = vmatprep.subr.mxu0 0.0
  %731 = vmatpush1.msra.mxu0 %v696
  %732 = vmatprep.subr.mxu0 0.0
  %733 = vmatpush1.msra.mxu0 %v697
  %734 = vmatprep.subr.mxu0 0.0
  %735 = vmatpush1.msra.mxu0 %v698
  %736 = vmatprep.subr.mxu0 0.0
  %737 = vmatpush1.msra.mxu0 %v699
  %738 = vmatprep.subr.mxu0 0.0
  %739 = vmatpush1.msra.mxu0 %v700
  %740 = vmatprep.subr.mxu0 0.0
  %741 = vmatpush1.msra.mxu0 %v701
  %742 = vmatprep.subr.mxu0 0.0
  %743 = vmatpush1.msra.mxu0 0.0
  %744 = vmatprep.subr.mxu0 0.0
  %745 = vmatpush1.msra.mxu0 0.0
  %746 = vmatprep.subr.mxu0 0.0
  %747 = vmatpush1.msra.mxu0 0.0
  %748 = vmatprep.subr.mxu0 0.0
  %749 = vmatpush1.msra.mxu0 0.0
  %750 = vmatprep.subr.mxu0 0.0
  %751 = vmatpush1.msra.mxu0 0.0
  %752 = vmatprep.subr.mxu0 0.0
  %753 = vmatpush1.msra.mxu0 0.0
  %754 = vmatprep.subr.mxu0 0.0
  %755 = vmatpush1.msra.mxu0 0.0
  %756 = vmatprep.subr.mxu0 0.0
  %757 = vmatpush1.msra.mxu0 0.0
  %758 = vmatprep.subr.mxu0 0.0
  %759 = vmatpush1.msra.mxu0 0.0
  %760 = vmatprep.subr.mxu0 0.0
  %761 = vmatpush1.msra.mxu0 0.0
  %762 = vmatprep.subr.mxu0 0.0
  %763 = vmatpush1.msra.mxu0 0.0
  %764 = vmatprep.subr.mxu0 0.0
  %765 = vmatpush1.msra.mxu0 0.0
  %766 = vmatprep.subr.mxu0 0.0
  %767 = vmatpush1.msra.mxu0 0.0
  %768 = vmatprep.subr.mxu0 0.0
  %769 = vmatpush1.msra.mxu0 0.0
  %770 = vmatprep.subr.mxu0 0.0
  %771 = vmatpush1.msra.mxu0 0.0
  %772 = vmatprep.subr.mxu0 0.0
  %773 = vmatpush1.msra.mxu0 0.0
  %774 = vmatprep.mubr.f32.mxu0 0.0
  %775 = vmatmul.mubr.f32.gmra.mrb[0].mxu0 %v684
  %v776 = vpop.f32.mrb[0].mxu0
  %v777 = vadd.f32 %v708, %v776
  %v778 = vpop.f32.mrb[0].mxu0
  %779 = vdwg.mxu0
  %v780 = vmax.f32 %v777, 0.0
  %s781 = scalar_lea.vmem %s1, 1024
  %v782 = vld [vmem:[%s781] sm:$0xff]
  %v783 = vld [vmem:[%s781 + $0x8] sm:$0xff]
  %v784 = vld [vmem:[%s781 + $0x10] sm:$0xff]
  %v785 = vld [vmem:[%s781 + $0x18] sm:$0xff]
  %v786 = vld [vmem:[%s781 + $0x20] sm:$0xff]
  %v787 = vld [vmem:[%s781 + $0x28] sm:$0xff]
  %v788 = vld [vmem:[%s781 + $0x30] sm:$0xff]
  %v789 = vld [vmem:[%s781 + $0x38] sm:$0xff]
  %v790 = vld [vmem:[%s781 + $0x40] sm:$0xff]
  %v791 = vld [vmem:[%s781 + $0x48] sm:$0xff]
  %v792 = vld [vmem:[%s781 + $0x50] sm:$0xff]
  %v793 = vld [vmem:[%s781 + $0x58] sm:$0xff]
  %v794 = vld [vmem:[%s781 + $0x60] sm:$0xff]
  %v795 = vld [vmem:[%s781 + $0x68] sm:$0xff]
  %v796 = vld [vmem:[%s781 + $0x70] sm:$0xff]
  %v797 = vld [vmem:[%s781 + $0x78] sm:$0xff]
  %s798 = scalar_lea.vmem %s2, 8
  %v799 = vld [vmem:[%s798] sm:$0x1]
  %v801 = vlaneseq
  %v802 = vshrl.u32 %v801, 7
  %v803 = vsub.s32 0, %v802
  %v804 = vrot.slane %v799, %v803
  %806 = vmatprep.subr.mxu0 0.0
  %807 = vmatpush1.msra.mxu0 %v782
  %808 = vmatprep.subr.mxu0 0.0
  %809 = vmatpush1.msra.mxu0 %v783
  %810 = vmatprep.subr.mxu0 0.0
  %811 = vmatpush1.msra.mxu0 %v784
  %812 = vmatprep.subr.mxu0 0.0
  %813 = vmatpush1.msra.mxu0 %v785
  %814 = vmatprep.subr.mxu0 0.0
  %815 = vmatpush1.msra.mxu0 %v786
  %816 = vmatprep.subr.mxu0 0.0
  %817 = vmatpush1.msra.mxu0 %v787
  %818 = vmatprep.subr.mxu0 0.0
  %819 = vmatpush1.msra.mxu0 %v788
  %820 = vmatprep.subr.mxu0 0.0
  %821 = vmatpush1.msra.mxu0 %v789
  %822 = vmatprep.subr.mxu0 0.0
  %823 = vmatpush1.msra.mxu0 %v790
  %824 = vmatprep.subr.mxu0 0.0
  %825 = vmatpush1.msra.mxu0 %v791
  %826 = vmatprep.subr.mxu0 0.0
  %827 = vmatpush1.msra.mxu0 %v792
  %828 = vmatprep.subr.mxu0 0.0
  %829 = vmatpush1.msra.mxu0 %v793
  %830 = vmatprep.subr.mxu0 0.0
  %831 = vmatpush1.msra.mxu0 %v794
  %832 = vmatprep.subr.mxu0 0.0
  %833 = vmatpush1.msra.mxu0 %v795
  %834 = vmatprep.subr.mxu0 0.0
  %835 = vmatpush1.msra.mxu0 %v796
  %836 = vmatprep.subr.mxu0 0.0
  %837 = vmatpush1.msra.mxu0 %v797
  %838 = vmatprep.subr.mxu0 0.0
  %839 = vmatpush1.msra.mxu0 0.0
  %840 = vmatprep.subr.mxu0 0.0
  %841 = vmatpush1.msra.mxu0 0.0
  %842 = vmatprep.subr.mxu0 0.0
  %843 = vmatpush1.msra.mxu0 0.0
  %844 = vmatprep.subr.mxu0 0.0
  %845 = vmatpush1.msra.mxu0 0.0
  %846 = vmatprep.subr.mxu0 0.0
  %847 = vmatpush1.msra.mxu0 0.0
  %848 = vmatprep.subr.mxu0 0.0
  %849 = vmatpush1.msra.mxu0 0.0
  %850 = vmatprep.subr.mxu0 0.0
  %851 = vmatpush1.msra.mxu0 0.0
  %852 = vmatprep.subr.mxu0 0.0
  %853 = vmatpush1.msra.mxu0 0.0
  %854 = vmatprep.subr.mxu0 0.0
  %855 = vmatpush1.msra.mxu0 0.0
  %856 = vmatprep.subr.mxu0 0.0
  %857 = vmatpush1.msra.mxu0 0.0
  %858 = vmatprep.subr.mxu0 0.0
  %859 = vmatpush1.msra.mxu0 0.0
  %860 = vmatprep.subr.mxu0 0.0
  %861 = vmatpush1.msra.mxu0 0.0
  %862 = vmatprep.subr.mxu0 0.0
  %863 = vmatpush1.msra.mxu0 0.0
  %864 = vmatprep.subr.mxu0 0.0
  %865 = vmatpush1.msra.mxu0 0.0
  %866 = vmatprep.subr.mxu0 0.0
  %867 = vmatpush1.msra.mxu0 0.0
  %868 = vmatprep.subr.mxu0 0.0
  %869 = vmatpush1.msra.mxu0 0.0
  %870 = vmatprep.mubr.f32.mxu0 0.0
  %871 = vmatmul.mubr.f32.gmra.mrb[0].mxu0 %v780
  %v872 = vpop.f32.mrb[0].mxu0
  %v873 = vadd.f32 %v804, %v872
  %v874 = vpop.f32.mrb[0].mxu0
  %875 = vdwg.mxu0
  %v876 = vmax.f32 %v873, 0.0
  %s877 = scalar_lea.vmem %s1, 1152
  %v878 = vld [vmem:[%s877] sm:$0xff]
  %v879 = vld [vmem:[%s877 + $0x8] sm:$0xff]
  %v880 = vld [vmem:[%s877 + $0x10] sm:$0xff]
  %v881 = vld [vmem:[%s877 + $0x18] sm:$0xff]
  %v882 = vld [vmem:[%s877 + $0x20] sm:$0xff]
  %v883 = vld [vmem:[%s877 + $0x28] sm:$0xff]
  %v884 = vld [vmem:[%s877 + $0x30] sm:$0xff]
  %v885 = vld [vmem:[%s877 + $0x38] sm:$0xff]
  %v886 = vld [vmem:[%s877 + $0x40] sm:$0xff]
  %v887 = vld [vmem:[%s877 + $0x48] sm:$0xff]
  %v888 = vld [vmem:[%s877 + $0x50] sm:$0xff]
  %v889 = vld [vmem:[%s877 + $0x58] sm:$0xff]
  %v890 = vld [vmem:[%s877 + $0x60] sm:$0xff]
  %v891 = vld [vmem:[%s877 + $0x68] sm:$0xff]
  %v892 = vld [vmem:[%s877 + $0x70] sm:$0xff]
  %v893 = vld [vmem:[%s877 + $0x78] sm:$0xff]
  %s894 = scalar_lea.vmem %s2, 9
  %v895 = vld [vmem:[%s894] sm:$0x1]
  %v897 = vlaneseq
  %v898 = vshrl.u32 %v897, 7
  %v899 = vsub.s32 0, %v898
  %v900 = vrot.slane %v895, %v899
  %902 = vmatprep.subr.mxu0 0.0
  %903 = vmatpush1.msra.mxu0 %v878
  %904 = vmatprep.subr.mxu0 0.0
  %905 = vmatpush1.msra.mxu0 %v879
  %906 = vmatprep.subr.mxu0 0.0
  %907 = vmatpush1.msra.mxu0 %v880
  %908 = vmatprep.subr.mxu0 0.0
  %909 = vmatpush1.msra.mxu0 %v881
  %910 = vmatprep.subr.mxu0 0.0
  %911 = vmatpush1.msra.mxu0 %v882
  %912 = vmatprep.subr.mxu0 0.0
  %913 = vmatpush1.msra.mxu0 %v883
  %914 = vmatprep.subr.mxu0 0.0
  %915 = vmatpush1.msra.mxu0 %v884
  %916 = vmatprep.subr.mxu0 0.0
  %917 = vmatpush1.msra.mxu0 %v885
  %918 = vmatprep.subr.mxu0 0.0
  %919 = vmatpush1.msra.mxu0 %v886
  %920 = vmatprep.subr.mxu0 0.0
  %921 = vmatpush1.msra.mxu0 %v887
  %922 = vmatprep.subr.mxu0 0.0
  %923 = vmatpush1.msra.mxu0 %v888
  %924 = vmatprep.subr.mxu0 0.0
  %925 = vmatpush1.msra.mxu0 %v889
  %926 = vmatprep.subr.mxu0 0.0
  %927 = vmatpush1.msra.mxu0 %v890
  %928 = vmatprep.subr.mxu0 0.0
  %929 = vmatpush1.msra.mxu0 %v891
  %930 = vmatprep.subr.mxu0 0.0
  %931 = vmatpush1.msra.mxu0 %v892
  %932 = vmatprep.subr.mxu0 0.0
  %933 = vmatpush1.msra.mxu0 %v893
  %934 = vmatprep.subr.mxu0 0.0
  %935 = vmatpush1.msra.mxu0 0.0
  %936 = vmatprep.subr.mxu0 0.0
  %937 = vmatpush1.msra.mxu0 0.0
  %938 = vmatprep.subr.mxu0 0.0
  %939 = vmatpush1.msra.mxu0 0.0
  %940 = vmatprep.subr.mxu0 0.0
  %941 = vmatpush1.msra.mxu0 0.0
  %942 = vmatprep.subr.mxu0 0.0
  %943 = vmatpush1.msra.mxu0 0.0
  %944 = vmatprep.subr.mxu0 0.0
  %945 = vmatpush1.msra.mxu0 0.0
  %946 = vmatprep.subr.mxu0 0.0
  %947 = vmatpush1.msra.mxu0 0.0
  %948 = vmatprep.subr.mxu0 0.0
  %949 = vmatpush1.msra.mxu0 0.0
  %950 = vmatprep.subr.mxu0 0.0
  %951 = vmatpush1.msra.mxu0 0.0
  %952 = vmatprep.subr.mxu0 0.0
  %953 = vmatpush1.msra.mxu0 0.0
  %954 = vmatprep.subr.mxu0 0.0
  %955 = vmatpush1.msra.mxu0 0.0
  %956 = vmatprep.subr.mxu0 0.0
  %957 = vmatpush1.msra.mxu0 0.0
  %958 = vmatprep.subr.mxu0 0.0
  %959 = vmatpush1.msra.mxu0 0.0
  %960 = vmatprep.subr.mxu0 0.0
  %961 = vmatpush1.msra.mxu0 0.0
  %962 = vmatprep.subr.mxu0 0.0
  %963 = vmatpush1.msra.mxu0 0.0
  %964 = vmatprep.subr.mxu0 0.0
  %965 = vmatpush1.msra.mxu0 0.0
  %966 = vmatprep.mubr.f32.mxu0 0.0
  %967 = vmatmul.mubr.f32.gmra.mrb[0].mxu0 %v876
  %v968 = vpop.f32.mrb[0].mxu0
  %v969 = vadd.f32 %v900, %v968
  %v970 = vpop.f32.mrb[0].mxu0
  %971 = vdwg.mxu0
  %v972 = vmax.f32 %v969, 0.0
  %v973 = vadd.f32 %v14, %v972
  %974 = vst [vmem:[%s3] sm:$0xff] %v973
  // Predicated region
  $region14: #{block_forward.1} parent=0 // pred_check
    _
  $region15: #{block_forward.1} parent=0 // pred_check_branch
    %976 = sbr.rel (0) target = $region17
  $region16: #{block_forward.1} parent=0 // pred_region
    _
  $region17: #{block_forward.1} parent=0 // pred_fallthru
    _
  // Predicated region
  $region18: #{block_forward.1} parent=0 // pred_check
    _
  $region19: #{block_forward.1} parent=0 // pred_check_branch
    %978 = sbr.rel (0) target = $region21
  $region20: #{block_forward.1} parent=0 // pred_region
    _
  $region21: #{block_forward.1} parent=0 // pred_fallthru
    _

</llo_original>
